<compile_context>
chip_gen: v7x
topology: tpu7x:2x2x1
jax: 0.10.0
libtpu: 0.0.40
codegen_flags: <defaults>
</compile_context>

<pallas_src>
import functools

import jax
import jax.numpy as jnp
from jax import lax
from jax.experimental import pallas as pl
from jax.experimental.pallas import tpu as pltpu

LANES = 128
MAX_BLOCK_ROWS = 8192  # 8192 * 128 * 4 B = 4 MiB per f32 input block


def _focal_loss_kernel(x_ref, t_ref, psum_ref, *, gamma_kind, gamma_val,
                       rows, block_rows, needs_mask):
    x = x_ref[...].astype(jnp.float32)
    t = t_ref[...].astype(jnp.float32)

    # F.binary_cross_entropy clamps each log term at -100 (PyTorch semantics).
    log_x = jnp.maximum(jnp.log(x), -100.0)
    log_1mx = jnp.maximum(jnp.log(1.0 - x), -100.0)
    # bce = -(t*log_x + (1-t)*log_1mx), refactored to save one multiply/elem.
    bce = -(log_1mx + t * (log_x - log_1mx))

    pt = jnp.exp(-bce)
    one_minus_pt = 1.0 - pt
    if gamma_kind == "int":
        mod = one_minus_pt ** gamma_val            # integer_pow -> VPU only
    elif gamma_kind == "half":
        # Clamp: approximate exp can make pt marginally > 1.
        c = jnp.maximum(one_minus_pt, 0.0)
        mod = jnp.sqrt(c) ** gamma_val             # sqrt + integer_pow
    else:
        c = jnp.maximum(one_minus_pt, 0.0)
        mod = c ** gamma_val                       # float pow (EUP exp+log)

    # alpha is applied once to the final scalar in the wrapper.
    focal = mod * bce

    if needs_mask:
        # Ragged final grid block: rows past the true row count hold
        # unspecified data; zero them out before the reduction (jnp.where
        # also discards any NaN/Inf produced from that garbage).
        row_start = pl.program_id(0) * block_rows
        rid = lax.broadcasted_iota(jnp.int32, focal.shape, 0)
        focal = jnp.where(rid + row_start < rows, focal, 0.0)

    # One sublane reduction per block -> lane-dense (1, 128) partial sum.
    psum_ref[...] = jnp.sum(focal, axis=0, keepdims=True)[None]


def _round_up(v, m):
    return ((v + m - 1) // m) * m


def focal_loss(inp, target, *, gamma=2, alpha=2, eps=1e-07):
    """Pallas TPU implementation of FocalLoss.forward (returns scalar mean)."""
    del eps  # unused by the PyTorch forward as well
    assert inp.shape == target.shape
    n_total = inp.size
    assert n_total > 0

    x = inp.reshape(-1)
    t = target.reshape(-1)

    # Pad only the sub-128 tail needed for the lane-dense reshape.  Padded
    # (x=0, t=0) pairs contribute exactly 0 focal loss (thanks to the -100
    # log clamp), so the mean over n_total is unaffected.  For n_total a
    # multiple of 128 (the common case) no copy is made at all.
    lane_pad = (-n_total) % LANES
    if lane_pad:
        x = jnp.pad(x, (0, lane_pad))
        t = jnp.pad(t, (0, lane_pad))
    rows = (n_total + lane_pad) // LANES
    x2d = x.reshape(rows, LANES)
    t2d = t.reshape(rows, LANES)

    # Sublane packing granularity: 8 rows (f32), 16 (bf16), 32 (int8/fp8).
    sub = max(8, 32 // min(x2d.dtype.itemsize, t2d.dtype.itemsize))

    if rows <= 2048:
        # Single block: a full-extent row dim is exempt from the (8,128)
        # divisibility rule, so no rounding and no in-kernel mask is needed.
        block_rows = rows
    elif rows <= MAX_BLOCK_ROWS:
        # Ensure >= 2 blocks so the "parallel" grid axis can be sharded
        # across both TensorCores (v7x megacore).
        block_rows = _round_up(pl.cdiv(rows, 2), sub)
    else:
        block_rows = MAX_BLOCK_ROWS  # already a multiple of 8/16/32

    num_blocks = pl.cdiv(rows, block_rows)
    needs_mask = (rows % block_rows) != 0

    g = float(gamma)
    if g == int(g):
        gamma_kind, gamma_val, n_transc = "int", int(g), 3
    elif 2.0 * g == int(2.0 * g):
        gamma_kind, gamma_val, n_transc = "half", int(2.0 * g), 4
    else:
        gamma_kind, gamma_val, n_transc = "float", g, 5
    # TODO(synk): optional hard-label fast path (pt = t*x + (1-t)*(1-x), one
    # log/elem) is not applied since targets may be soft probabilities.

    kernel = functools.partial(
        _focal_loss_kernel,
        gamma_kind=gamma_kind,
        gamma_val=gamma_val,
        rows=rows,
        block_rows=block_rows,
        needs_mask=needs_mask,
    )

    in_bytes = x2d.size * x2d.dtype.itemsize + t2d.size * t2d.dtype.itemsize
    cost = pl.CostEstimate(
        flops=10 * n_total,
        transcendentals=n_transc * n_total,
        bytes_accessed=in_bytes + num_blocks * LANES * 4,
    )

    psums = pl.pallas_call(
        kernel,
        out_shape=jax.ShapeDtypeStruct((num_blocks, 1, LANES), jnp.float32),
        grid_spec=pltpu.PrefetchScalarGridSpec(
            num_scalar_prefetch=0,
            grid=(num_blocks,),
            in_specs=[
                pl.BlockSpec((block_rows, LANES), lambda i: (i, 0)),
                pl.BlockSpec((block_rows, LANES), lambda i: (i, 0)),
            ],
            out_specs=pl.BlockSpec((1, 1, LANES), lambda i: (i, 0, 0)),
        ),
        compiler_params=pltpu.CompilerParams(
            dimension_semantics=("parallel",),
            vmem_limit_bytes=32 * 1024 * 1024,
        ),
        cost_estimate=cost,
    )(x2d, t2d)

    # Tiny final reduction + alpha scale + mean in the wrapper.
    return (float(alpha) * jnp.sum(psums)) / jnp.float32(n_total)


def focal_loss_ref(inp, target, *, gamma=2, alpha=2):
    x = inp.astype(jnp.float32)
    t = target.astype(jnp.float32)
    bce = -(t * jnp.maximum(jnp.log(x), -100.0)
            + (1.0 - t) * jnp.maximum(jnp.log(1.0 - x), -100.0))
    pt = jnp.exp(-bce)
    return jnp.mean(alpha * (1.0 - pt) ** gamma * bce)


if __name__ == "__main__":
    key = jax.random.PRNGKey(0)
    k1, k2, k3, k4 = jax.random.split(key, 4)

    # NCHW probabilities: batch=2, channels=4, spatial=16x16.
    x = jax.nn.sigmoid(jax.random.normal(k1, (2, 4, 16, 16), dtype=jnp.float32))
    t = (jax.random.uniform(k2, (2, 4, 16, 16)) > 0.5).astype(jnp.float32)

    loss = focal_loss(x, t, gamma=2, alpha=2)
    jax.block_until_ready(loss)
    ref = focal_loss_ref(x, t, gamma=2, alpha=2)
    assert jnp.allclose(loss, ref, rtol=1e-5, atol=1e-6), (loss, ref)

    # Unaligned element count (2*4*5*7 = 280): exercises the sub-128 tail pad
    # and the full-extent single-block path.
    x2 = jax.nn.sigmoid(jax.random.normal(k3, (2, 4, 5, 7), dtype=jnp.float32))
    t2 = (jax.random.uniform(k4, (2, 4, 5, 7)) > 0.5).astype(jnp.float32)
    loss2 = focal_loss(x2, t2, gamma=2, alpha=2)
    jax.block_until_ready(loss2)
    ref2 = focal_loss_ref(x2, t2, gamma=2, alpha=2)
    assert jnp.allclose(loss2, ref2, rtol=1e-5, atol=1e-6), (loss2, ref2)

    print("KERNEL_OK")
</pallas_src>

<mosaic_0001>
module attributes {stable_mosaic.version = 11 : i64} {
  func.func @_focal_loss_kernel(%arg0: i32, %arg1: memref<16x128xf32, #tpu.memory_space<vmem>>, %arg2: memref<16x128xf32, #tpu.memory_space<vmem>>, %arg3: memref<1x1x128xf32, #tpu.memory_space<vmem>>) attributes {dimension_semantics = [#tpu.dimension_semantics<parallel>], iteration_bounds = array<i64: 1>, scalar_prefetch = 0 : i64, scratch_operands = 0 : i64, tpu.core_type = #tpu.core_type<tc>, window_params = [{transform_indices = @transform_0, window_bounds = array<i64: 16, 128>}, {transform_indices = @transform_1, window_bounds = array<i64: 16, 128>}, {transform_indices = @transform_2, window_bounds = array<i64: 1, 1, 128>}]} {
    %c0 = arith.constant 0 : index
    %c0_0 = arith.constant 0 : index
    %0 = vector.load %arg1[%c0, %c0_0] : memref<16x128xf32, #tpu.memory_space<vmem>>, vector<16x128xf32>
    %c0_1 = arith.constant 0 : index
    %c0_2 = arith.constant 0 : index
    %1 = vector.load %arg2[%c0_1, %c0_2] : memref<16x128xf32, #tpu.memory_space<vmem>>, vector<16x128xf32>
    %2 = math.log %0 : vector<16x128xf32>
    %cst = arith.constant -1.000000e+02 : f32
    %3 = vector.broadcast %cst : f32 to vector<16x128xf32>
    %4 = arith.maximumf %2, %3 : vector<16x128xf32>
    %cst_3 = arith.constant 1.000000e+00 : f32
    %5 = vector.broadcast %cst_3 : f32 to vector<16x128xf32>
    %6 = arith.subf %5, %0 : vector<16x128xf32>
    %7 = math.log %6 : vector<16x128xf32>
    %cst_4 = arith.constant -1.000000e+02 : f32
    %8 = vector.broadcast %cst_4 : f32 to vector<16x128xf32>
    %9 = arith.maximumf %7, %8 : vector<16x128xf32>
    %10 = arith.subf %4, %9 : vector<16x128xf32>
    %11 = arith.mulf %1, %10 : vector<16x128xf32>
    %12 = arith.addf %9, %11 : vector<16x128xf32>
    %cst_5 = arith.constant 0.000000e+00 : f32
    %13 = vector.broadcast %cst_5 : f32 to vector<16x128xf32>
    %14 = arith.subf %13, %12 : vector<16x128xf32>
    %cst_6 = arith.constant 0.000000e+00 : f32
    %15 = vector.broadcast %cst_6 : f32 to vector<16x128xf32>
    %16 = arith.subf %15, %14 : vector<16x128xf32>
    %17 = math.exp %16 : vector<16x128xf32>
    %cst_7 = arith.constant 1.000000e+00 : f32
    %18 = vector.broadcast %cst_7 : f32 to vector<16x128xf32>
    %19 = arith.subf %18, %17 : vector<16x128xf32>
    %20 = arith.mulf %19, %19 : vector<16x128xf32>
    %21 = arith.mulf %20, %14 : vector<16x128xf32>
    %cst_8 = arith.constant dense<0.000000e+00> : vector<128xf32>
    %22 = vector.multi_reduction <add>, %21, %cst_8 [0] : vector<16x128xf32> to vector<128xf32>
    %23 = vector.shape_cast %22 : vector<128xf32> to vector<1x128xf32>
    %24 = vector.shape_cast %23 : vector<1x128xf32> to vector<1x1x128xf32>
    %c0_9 = arith.constant 0 : index
    %c0_10 = arith.constant 0 : index
    %c0_11 = arith.constant 0 : index
    %25 = vector.load %arg3[%c0_9, %c0_10, %c0_11] : memref<1x1x128xf32, #tpu.memory_space<vmem>>, vector<1x1x128xf32>
    tpu.vector_store %arg3[%c0_9, %c0_10, %c0_11], %24 {strides = array<i32>} : memref<1x1x128xf32, #tpu.memory_space<vmem>>, vector<1x1x128xf32>,
    return
  }
  func.func @transform_0(%arg0: i32) -> (i32, i32) {
    %c0_i32 = arith.constant 0 : i32
    %c0_i32_0 = arith.constant 0 : i32
    return %arg0, %c0_i32 : i32, i32
  }
  func.func @transform_1(%arg0: i32) -> (i32, i32) {
    %c0_i32 = arith.constant 0 : i32
    %c0_i32_0 = arith.constant 0 : i32
    return %arg0, %c0_i32 : i32, i32
  }
  func.func @transform_2(%arg0: i32) -> (i32, i32, i32) {
    %c0_i32 = arith.constant 0 : i32
    %c0_i32_0 = arith.constant 0 : i32
    %c0_i32_1 = arith.constant 0 : i32
    return %arg0, %c0_i32, %c0_i32_0 : i32, i32, i32
  }
}

</mosaic_0001>

<llo_original>
// kernel: tpu_custom_call.1
$region0: #{tpu_custom_call.1}
  #allocation0 [shape = 'u32[]', space=smem, size = 0x4, offset = 0x4, fixed_abs, tag = 'smem constant byte address 0x4 - core index']
  #allocation1 [shape = 'u32[144,128]{1,0:T(1,128)}', space=vmem, size = 0x12000, scoped, tag = 'internal scratch']
  %s0 = inlined_call_operand.hbm [shape: f32[16,128], index: 0, kind: input, shape index: {}]
  %s1 = inlined_call_operand.hbm [shape: f32[16,128], index: 1, kind: input, shape index: {}]
  %s2 = inlined_call_operand.hbm [shape: f32[1,1,128], index: 2, kind: output, shape index: {}]
  %s3 = sld [smem:[#allocation0]]
  $region26: #{tpu_custom_call.1} parent=0
    _
  %s5 = ssub.s32 1, %s3
  %s6 = scalar_select 0, %s5, %s3
  $region1: #{tpu_custom_call.1} parent=0
    #allocation2 [shape = 'u8[8192]{0}', space=vmem, size = 0x2000, scoped, tag = 'input window, operand 0, single buffered']
    #allocation3 [shape = 's32[1]{0}', space=sflag, size = 0x4, scoped, tag = 'scoped memory for tpu_custom_call.1']
    #allocation4 [shape = 's32[1]{0}', space=sflag, size = 0x4, scoped, tag = 'scoped memory for tpu_custom_call.1']
    #allocation5 [shape = 'u8[8192]{0}', space=vmem, size = 0x2000, scoped, tag = 'input window, operand 1, single buffered']
    #allocation6 [shape = 's32[1]{0}', space=sflag, size = 0x4, scoped, tag = 'scoped memory for tpu_custom_call.1']
    #allocation7 [shape = 'u8[512]{0}', space=vmem, size = 0x400, scoped, tag = 'output window, operand 0, single buffered']
    %7 = vsyncpa [#allocation3], 0
    %8 = vsyncpa [#allocation6], 0
    %9 = vsyncpa [#allocation4], 0
    // Predicated region
    $region2: #{tpu_custom_call.1} parent=1 // pred_check
      _
    $region3: #{tpu_custom_call.1} parent=1 // pred_check_branch
      %11 = sbr.rel (0) target = $region5
    $region4: #{tpu_custom_call.1} parent=1 // pred_region
      %s13 = ssub.s32 256, 256
      %14 = vsyncadd [#allocation3], %s13
      %s15 = sshll.u32 [#allocation2], 4
      %s16 = int_to_ptr.vmem [resolvable:$true] %s15
      %21 = dma.hbm_to_vmem [thread:$0]  %s0, 256, %s16, [#allocation3], 128, 128, 8
    $region5: #{tpu_custom_call.1} parent=1 // pred_fallthru
      _
    // Predicated region
    $region6: #{tpu_custom_call.1} parent=1 // pred_check
      _
    $region7: #{tpu_custom_call.1} parent=1 // pred_check_branch
      %23 = sbr.rel (0) target = $region9
    $region8: #{tpu_custom_call.1} parent=1 // pred_region
      %s25 = ssub.s32 256, 256
      %26 = vsyncadd [#allocation6], %s25
      %s27 = sshll.u32 [#allocation5], 4
      %s28 = int_to_ptr.vmem [resolvable:$true] %s27
      %33 = dma.hbm_to_vmem [thread:$0]  %s1, 256, %s28, [#allocation6], 128, 128, 8
    $region9: #{tpu_custom_call.1} parent=1 // pred_fallthru
      _
    // Predicated region
    $region10: #{tpu_custom_call.1} parent=1 // pred_check
      _
    $region11: #{tpu_custom_call.1} parent=1 // pred_check_branch
      %35 = sbr.rel (0) target = $region13
    $region12: #{tpu_custom_call.1} parent=1 // pred_region
      %36 = dma.done [#allocation3], 256
    $region13: #{tpu_custom_call.1} parent=1 // pred_fallthru
      _
    // Predicated region
    $region14: #{tpu_custom_call.1} parent=1 // pred_check
      _
    $region15: #{tpu_custom_call.1} parent=1 // pred_check_branch
      %38 = sbr.rel (0) target = $region17
    $region16: #{tpu_custom_call.1} parent=1 // pred_region
      %39 = dma.done [#allocation6], 256
    $region17: #{tpu_custom_call.1} parent=1 // pred_fallthru
      _
    %v40 = vld [vmem:[#allocation2] sm:$0xff]
    %v41 = vld [vmem:[#allocation2 + $0x8] sm:$0xff]
    %v42 = vld [vmem:[#allocation5] sm:$0xff]
    %v43 = vld [vmem:[#allocation5 + $0x8] sm:$0xff]
    %v44 = vlog2.pop %v40
    %v45 = vmul.f32 %v44, 0.6931472
    %v46 = vlog2.pop %v41
    %v47 = vmul.f32 %v46, 0.6931472
    %v48 = vmax.f32 %v45, -100.0
    %v49 = vmax.f32 %v47, -100.0
    %v50 = vsub.f32 1.0, %v40
    %v51 = vsub.f32 1.0, %v41
    %v52 = vlog2.pop %v50
    %v53 = vmul.f32 %v52, 0.6931472
    %v54 = vlog2.pop %v51
    %v55 = vmul.f32 %v54, 0.6931472
    %v56 = vmax.f32 %v53, -100.0
    %v57 = vmax.f32 %v55, -100.0
    %v58 = vsub.f32 %v48, %v56
    %v59 = vsub.f32 %v49, %v57
    %v60 = vmul.f32 %v42, %v58
    %v61 = vmul.f32 %v43, %v59
    %v62 = vadd.f32 %v56, %v60
    %v63 = vadd.f32 %v57, %v61
    %v64 = vsub.f32 0.0, %v62
    %v65 = vsub.f32 0.0, %v63
    %v66 = vsub.f32 0.0, %v64
    %v67 = vsub.f32 0.0, %v65
    %v68 = vmul.f32 %v66, 1.442695
    %v69 = vpow.pop %v68
    %v70 = vmul.f32 %v67, 1.442695
    %v71 = vpow.pop %v70
    %v72 = vsub.f32 1.0, %v69
    %v73 = vsub.f32 1.0, %v71
    %v74 = vmul.f32 %v72, %v72
    %v75 = vmul.f32 %v73, %v73
    %v76 = vmul.f32 %v74, %v64
    %v77 = vmul.f32 %v75, %v65
    %v78 = vadd.f32 %v76, %v77
    %v79 = vrot.slane %v78, 4
    %v80 = vadd.f32 %v78, %v79
    %v81 = vrot.slane %v80, 2
    %v82 = vadd.f32 %v80, %v81
    %v83 = vrot.slane %v82, 1
    %v84 = vadd.f32 %v82, %v83
    %85 = vst [vmem:[#allocation7] sm:$0x1] %v84
    // Predicated region
    $region18: #{tpu_custom_call.1} parent=1 // pred_check
      _
    $region19: #{tpu_custom_call.1} parent=1 // pred_check_branch
      %87 = sbr.rel (0) target = $region21
    $region20: #{tpu_custom_call.1} parent=1 // pred_region
      %s89 = ssub.s32 16, 16
      %90 = vsyncadd [#allocation4], %s89
      %s92 = sshll.u32 [#allocation7], 4
      %s93 = int_to_ptr.vmem [resolvable:$true] %s92
      %95 = dma.vmem_to_hbm [thread:$0]  %s93, 16, %s2, [#allocation4]
    $region21: #{tpu_custom_call.1} parent=1 // pred_fallthru
      _
    // Predicated region
    $region22: #{tpu_custom_call.1} parent=1 // pred_check
      _
    $region23: #{tpu_custom_call.1} parent=1 // pred_check_branch
      %97 = sbr.rel (0) target = $region25
    $region24: #{tpu_custom_call.1} parent=1 // pred_region
      %98 = dma.done [#allocation4], 16
    $region25: #{tpu_custom_call.1} parent=1 // pred_fallthru
      _
    %99 = vsyncpa [#allocation3], 1
    %100 = vsyncpa [#allocation6], 1
    %101 = vsyncpa [#allocation4], 1

</llo_original>
